<compile_context>
chip_gen: v7x
topology: tpu7x:2x2x1
jax: 0.10.0
libtpu: 0.0.40
codegen_flags: <defaults>
</compile_context>

<pallas_src>
import jax
import jax.numpy as jnp
from jax.experimental import pallas as pl
from jax.experimental.pallas import tpu as pltpu


def _round_up(x, m):
    return ((x + m - 1) // m) * m


def _patch_embed_kernel(x_ref, w_ref, b_ref, o_ref):
    # x_ref: (TILE_M, K_pad) compute dtype     w_ref: (K_pad, E) compute dtype (grid-resident)
    # b_ref: (1, E) f32 (grid-resident)        o_ref: (TILE_M, E) out dtype (bf16 by default)
    # Single expression: MXU result -> f32 bias add -> cast -> store (no named f32 temporary).
    o_ref[...] = (
        jnp.dot(x_ref[...], w_ref[...], preferred_element_type=jnp.float32) + b_ref[...]
    ).astype(o_ref.dtype)


def _choose_tile_m(M, K_pad, E, in_itemsize, out_itemsize):
    """Shape-aware TILE_M.

    Fits the streamed, double-buffered input/output tiles in ~24 MiB of VMEM (leaves headroom for
    the resident weight and for v7x's 64 MiB part under the 32 MiB scoped limit), rounds to 16 rows
    (bf16 sublane packing), and caps near M/2 so the 'parallel' grid has >= 2 steps whenever M
    allows (keeps both v7x TensorCores busy; harmless on single-TC v5e/v6e).
    """
    per_row = 2 * K_pad * in_itemsize + 2 * E * out_itemsize   # double-buffered in + out, bytes/row
    tm = (24 * 1024 * 1024) // max(per_row, 1)
    tm = max(16, min(1024, tm))
    tm = min(tm, max(16, _round_up(pl.cdiv(M, 2), 16)))        # >= 2 grid steps when M allows
    tm = _round_up(tm, 16)
    tm = min(tm, _round_up(M, 8))                              # never (much) larger than M itself
    return max(8, (tm // 8) * 8)


def patch_embed_forward(x, weight, bias, patch_size, *, flatten=True,
                        compute_dtype=jnp.bfloat16, out_dtype=None):
    """ModifiedPatchEmbed.forward.

    x: (B, C, H, W).  weight: (E, C, p, p) PyTorch OIHW.  bias: (E,).
    Returns (B, num_patches, E) if flatten else (B, E, H//p, W//p).

    compute_dtype=jnp.bfloat16 matches a bf16 inference model; pass jnp.float32 (and
    out_dtype=jnp.float32) for exact parity with PyTorch's f32 conv (e.g. for the LRP pass).
    """
    B, C, H, W = x.shape
    E = weight.shape[0]
    p = patch_size
    assert H % p == 0 and W % p == 0, "image size must be divisible by patch size"
    gh, gw = H // p, W // p
    num_patches = gh * gw
    out_dtype = compute_dtype if out_dtype is None else out_dtype

    M = B * num_patches
    K = C * p * p
    K_pad = _round_up(K, 128) if K % 128 else K     # lane-dense streamed tiles / even MXU cadence

    # ---- glue: ONE fused XLA pass (transpose + cast + optional K pad) --------------------------
    # (B, C, gh, p, gw, p) -> (B, gh, gw, C, p, p) -> (M, K); K order = (C, ph, pw) = OIHW.
    xp = jnp.transpose(x.reshape(B, C, gh, p, gw, p), (0, 2, 4, 1, 3, 5))
    patches = xp.reshape(M, K).astype(compute_dtype)
    # conv weight (E, C, p, p) -> GEMM weight (K, E); bias kept f32 for the epilogue add.
    w_mat = weight.reshape(E, K).T.astype(compute_dtype)
    b_mat = bias.astype(jnp.float32).reshape(1, E)
    if K_pad != K:
        patches = jnp.pad(patches, ((0, 0), (0, K_pad - K)))
        w_mat = jnp.pad(w_mat, ((0, K_pad - K), (0, 0)))

    in_itemsize = jnp.dtype(compute_dtype).itemsize
    out_itemsize = jnp.dtype(out_dtype).itemsize
    tm = _choose_tile_m(M, K_pad, E, in_itemsize, out_itemsize)
    grid_m = pl.cdiv(M, tm)

    cost = pl.CostEstimate(
        flops=2 * M * K_pad * E,
        transcendentals=0,
        bytes_accessed=(M * K_pad * in_itemsize + K_pad * E * in_itemsize
                        + E * 4 + M * E * out_itemsize),
    )

    out = pl.pallas_call(
        _patch_embed_kernel,
        out_shape=jax.ShapeDtypeStruct((M, E), out_dtype),
        grid=(grid_m,),
        in_specs=[
            pl.BlockSpec((tm, K_pad), lambda i: (i, 0)),    # streamed patch rows
            pl.BlockSpec((K_pad, E), lambda i: (0, 0)),     # weight: VMEM-resident, never re-DMA'd
            pl.BlockSpec((1, E), lambda i: (0, 0)),         # bias: resident
        ],
        out_specs=pl.BlockSpec((tm, E), lambda i: (i, 0)),  # E = full last dim: no pad/slice pass
        compiler_params=pltpu.CompilerParams(
            dimension_semantics=("parallel",),              # megacore / 2-TC sharding over M tiles
            vmem_limit_bytes=32 * 1024 * 1024,
        ),
        cost_estimate=cost,
    )(patches, w_mat, b_mat)

    if flatten:
        # flatten(2).transpose(1, 2): (M, E) already is (B*num_patches, E) -> free reshape, no copy.
        out = out.reshape(B, num_patches, E)
    else:
        out = jnp.transpose(out.reshape(B, gh, gw, E), (0, 3, 1, 2))
    # self.norm: timm PatchEmbed default is nn.Identity -> no-op (see TODO at top for LayerNorm).
    return out


def _reference_forward(x, weight, bias, patch_size):
    """Pure-JAX f32 reference (conv via lax.conv_general_dilated) for the correctness check."""
    y = jax.lax.conv_general_dilated(
        x, weight,
        window_strides=(patch_size, patch_size),
        padding="VALID",
        dimension_numbers=("NCHW", "OIHW", "NCHW"),
    ) + bias.reshape(1, -1, 1, 1)
    B, E, gh, gw = y.shape
    return jnp.transpose(y.reshape(B, E, gh * gw), (0, 2, 1))


if __name__ == "__main__":
    # small shapes consistent with the module (exercises the K-padding path and a 2-step grid)
    B, C, H, W = 2, 4, 16, 16
    patch_size = 4
    embed_dim = 32

    key = jax.random.PRNGKey(0)
    kx, kw, kb = jax.random.split(key, 3)
    x = jax.random.normal(kx, (B, C, H, W), dtype=jnp.float32)
    # synthetic conv params (shape = Conv2d(C, embed_dim, patch, patch))
    weight = 0.02 * jax.random.normal(kw, (embed_dim, C, patch_size, patch_size), dtype=jnp.float32)
    bias = 0.01 * jax.random.normal(kb, (embed_dim,), dtype=jnp.float32)

    fwd = jax.jit(lambda a, w, b: patch_embed_forward(a, w, b, patch_size))
    out = jax.block_until_ready(fwd(x, weight, bias))

    ref = _reference_forward(x, weight, bias, patch_size)
    num_patches = (H // patch_size) * (W // patch_size)
    assert out.shape == (B, num_patches, embed_dim), out.shape
    assert out.dtype == jnp.bfloat16, out.dtype
    out_f32 = out.astype(jnp.float32)
    # bf16 operands + bf16 output (f32 accumulation) -> looser tolerance than pure f32.
    assert jnp.allclose(out_f32, ref, atol=3e-2, rtol=3e-2), float(jnp.max(jnp.abs(out_f32 - ref)))

    print("KERNEL_OK")
</pallas_src>

<mosaic_0001>
module attributes {stable_mosaic.version = 11 : i64} {
  func.func @_patch_embed_kernel(%arg0: i32, %arg1: memref<16x128xbf16, #tpu.memory_space<vmem>>, %arg2: memref<128x32xbf16, #tpu.memory_space<vmem>>, %arg3: memref<1x32xf32, #tpu.memory_space<vmem>>, %arg4: memref<16x32xbf16, #tpu.memory_space<vmem>>) attributes {dimension_semantics = [#tpu.dimension_semantics<parallel>], iteration_bounds = array<i64: 2>, scalar_prefetch = 0 : i64, scratch_operands = 0 : i64, tpu.core_type = #tpu.core_type<tc>, window_params = [{transform_indices = @transform_0, window_bounds = array<i64: 16, 128>}, {pipeline_mode = #tpu.pipeline_mode<synchronous>, transform_indices = @transform_1, window_bounds = array<i64: 128, 32>}, {pipeline_mode = #tpu.pipeline_mode<synchronous>, transform_indices = @transform_2, window_bounds = array<i64: 1, 32>}, {transform_indices = @transform_3, window_bounds = array<i64: 16, 32>}]} {
    %c0 = arith.constant 0 : index
    %c0_0 = arith.constant 0 : index
    %0 = vector.load %arg1[%c0, %c0_0] : memref<16x128xbf16, #tpu.memory_space<vmem>>, vector<16x128xbf16>
    %c0_1 = arith.constant 0 : index
    %c0_2 = arith.constant 0 : index
    %1 = vector.load %arg2[%c0_1, %c0_2] : memref<128x32xbf16, #tpu.memory_space<vmem>>, vector<128x32xbf16>
    %cst = arith.constant dense<0.000000e+00> : vector<16x32xf32>
    %2 = tpu.matmul %0, %1, %cst {dimension_numbers = #tpu.dot_dimension_numbers<[1], [0], [0], [1], [0, 0, 1, 1], [], []>} : vector<16x128xbf16>, vector<128x32xbf16>, vector<16x32xf32> -> vector<16x32xf32>
    %c0_3 = arith.constant 0 : index
    %c0_4 = arith.constant 0 : index
    %3 = vector.load %arg3[%c0_3, %c0_4] : memref<1x32xf32, #tpu.memory_space<vmem>>, vector<1x32xf32>
    %4 = vector.broadcast %3 : vector<1x32xf32> to vector<16x32xf32>
    %5 = arith.addf %2, %4 : vector<16x32xf32>
    %6 = arith.truncf %5 : vector<16x32xf32> to vector<16x32xbf16>
    %c0_5 = arith.constant 0 : index
    %c0_6 = arith.constant 0 : index
    %7 = vector.load %arg4[%c0_5, %c0_6] : memref<16x32xbf16, #tpu.memory_space<vmem>>, vector<16x32xbf16>
    tpu.vector_store %arg4[%c0_5, %c0_6], %6 {strides = array<i32>} : memref<16x32xbf16, #tpu.memory_space<vmem>>, vector<16x32xbf16>,
    return
  }
  func.func @transform_0(%arg0: i32) -> (i32, i32) {
    %c0_i32 = arith.constant 0 : i32
    %c0_i32_0 = arith.constant 0 : i32
    return %arg0, %c0_i32 : i32, i32
  }
  func.func @transform_1(%arg0: i32) -> (i32, i32) {
    %c0_i32 = arith.constant 0 : i32
    %c0_i32_0 = arith.constant 0 : i32
    %c0_i32_1 = arith.constant 0 : i32
    return %c0_i32, %c0_i32_0 : i32, i32
  }
  func.func @transform_2(%arg0: i32) -> (i32, i32) {
    %c0_i32 = arith.constant 0 : i32
    %c0_i32_0 = arith.constant 0 : i32
    %c0_i32_1 = arith.constant 0 : i32
    return %c0_i32, %c0_i32_0 : i32, i32
  }
  func.func @transform_3(%arg0: i32) -> (i32, i32) {
    %c0_i32 = arith.constant 0 : i32
    %c0_i32_0 = arith.constant 0 : i32
    return %arg0, %c0_i32 : i32, i32
  }
}

</mosaic_0001>

<llo_original>
// kernel: _lambda_.1
$region0: #{_lambda_.1}
  #allocation0 [shape = 'u32[]', space=smem, size = 0x4, offset = 0x4, fixed_abs, tag = 'smem constant byte address 0x4 - core index']
  #allocation1 [shape = 'u32[144,128]{1,0:T(1,128)}', space=vmem, size = 0x12000, scoped, tag = 'internal scratch']
  %s0 = inlined_call_operand.vmem [shape: bf16[32,128], index: 0, kind: input, shape index: {}]
  %s1 = inlined_call_operand.vmem [shape: bf16[128,32], index: 1, kind: input, shape index: {}]
  %s2 = inlined_call_operand.vmem [shape: f32[1,32], index: 2, kind: input, shape index: {}]
  %s3 = inlined_call_operand.hbm [shape: bf16[32,32], index: 3, kind: output, shape index: {}]
  %s4 = sld [smem:[#allocation0]]
  $region45: #{_lambda_.1} parent=0
    _
  %s6 = ssub.s32 1, %s4
  %s7 = scalar_select 0, %s6, %s4
  $region1: #{_lambda_.1} parent=0
    #allocation2 [shape = 'u8[8192]{0}', space=vmem, size = 0x2000, scoped, tag = 'output window, operand 0']
    #allocation3 [shape = 's32[2]{0}', space=sflag, size = 0x8, scoped, tag = 'scoped memory for _lambda_.1']
    %8 = vsyncpa [#allocation3], 0
    %s9 = scalar_lea.sflag [#allocation3], 1
    %10 = vsyncpa %s9, 0
    loop: start=0, step=1, limit=4
    $region2: #{_lambda_.1} parent=1 // loop_pre_header
      _
    $region3: #{_lambda_.1} parent=1 // loop_header
      %s12 = sphi 0, %s16
      %p13 = scmp.ge.s32.totalorder %s12, 4
      %s22 = sphi 0, %s24
      %s25 = sphi 0, %s22
      %s26 = sphi 0, %s25
      %s42 = sphi 0, %s26
      %s46 = sphi 0, %s46
      %s48 = sphi 0, %s46
      %s49 = sphi 0, %s48
      %s63 = sphi 0, %s49
      %s67 = sphi 0, %s67
      %s69 = sphi 0, %s67
      %s70 = sphi 0, %s69
      %s84 = sphi 0, %s70
      %s90 = sphi 0, %s92
      %s93 = sphi 0, %s90
      %s94 = sphi 0, %s93
      %s110 = sphi 0, %s94
    $region4: #{_lambda_.1} parent=1 // loop_header_branch
      %15 = sbr.rel (%p13) target = $region8
    $region5: #{_lambda_.1} parent=1 // loop_body
      %s17 = ssub.s32 %s12, 1
      %s18 = ssub.s32 %s12, 2
      %s19 = sadd.s32 %s12, 1
      %s20 = ssub.s32 %s12, %s19
      %p21 = scmp.eq.s32.totalorder %s20, 0
      %s23 = sadd.s32 %s22, 1
      %s24 = scalar_select %p21, %s22, %s23
      %p27 = pneg %p21
      %p28 = scmp.eq.s32.totalorder %s12, 1
      %p29 = por %p27, %p28
      %p30 = scmp.ne.s32.totalorder %s22, %s25
      %p31 = scmp.eq.s32.totalorder %s12, 0
      %p32 = por %p30, %p31
      %p33 = scmp.ne.s32.totalorder %s22, %s25
      %p34 = scmp.eq.s32.totalorder %s17, 1
      %p35 = por %p33, %p34
      %p36 = scmp.ne.s32.totalorder %s25, %s26
      %p37 = scmp.eq.s32.totalorder %s17, 0
      %p38 = por %p36, %p37
      %p39 = scmp.ne.s32.totalorder %s25, %s26
      %p40 = scmp.eq.s32.totalorder %s18, 1
      %p41 = por %p39, %p40
      %p43 = scmp.ne.s32.totalorder %s26, %s42
      %p44 = scmp.eq.s32.totalorder %s18, 0
      %p45 = por %p43, %p44
      %s47 = sadd.s32 %s46, 1
      %p50 = scmp.eq.s32.totalorder %s12, 1
      %p51 = scmp.ne.s32.totalorder %s46, %s48
      %p52 = scmp.eq.s32.totalorder %s12, 0
      %p53 = por %p51, %p52
      %p54 = scmp.ne.s32.totalorder %s46, %s48
      %p55 = scmp.eq.s32.totalorder %s17, 1
      %p56 = por %p54, %p55
      %p57 = scmp.ne.s32.totalorder %s48, %s49
      %p58 = scmp.eq.s32.totalorder %s17, 0
      %p59 = por %p57, %p58
      %p60 = scmp.ne.s32.totalorder %s48, %s49
      %p61 = scmp.eq.s32.totalorder %s18, 1
      %p62 = por %p60, %p61
      %p64 = scmp.ne.s32.totalorder %s49, %s63
      %p65 = scmp.eq.s32.totalorder %s18, 0
      %p66 = por %p64, %p65
      %s68 = sadd.s32 %s67, 1
      %p71 = scmp.eq.s32.totalorder %s12, 1
      %p72 = scmp.ne.s32.totalorder %s67, %s69
      %p73 = scmp.eq.s32.totalorder %s12, 0
      %p74 = por %p72, %p73
      %p75 = scmp.ne.s32.totalorder %s67, %s69
      %p76 = scmp.eq.s32.totalorder %s17, 1
      %p77 = por %p75, %p76
      %p78 = scmp.ne.s32.totalorder %s69, %s70
      %p79 = scmp.eq.s32.totalorder %s17, 0
      %p80 = por %p78, %p79
      %p81 = scmp.ne.s32.totalorder %s69, %s70
      %p82 = scmp.eq.s32.totalorder %s18, 1
      %p83 = por %p81, %p82
      %p85 = scmp.ne.s32.totalorder %s70, %s84
      %p86 = scmp.eq.s32.totalorder %s18, 0
      %p87 = por %p85, %p86
      %s88 = ssub.s32 %s12, %s19
      %p89 = scmp.eq.s32.totalorder %s88, 0
      %s91 = sadd.s32 %s90, 1
      %s92 = scalar_select %p89, %s90, %s91
      %p95 = pneg %p89
      %p96 = scmp.eq.s32.totalorder %s12, 1
      %p97 = por %p95, %p96
      %p98 = scmp.ne.s32.totalorder %s90, %s93
      %p99 = scmp.eq.s32.totalorder %s12, 0
      %p100 = por %p98, %p99
      %p101 = scmp.ne.s32.totalorder %s90, %s93
      %p102 = scmp.eq.s32.totalorder %s17, 1
      %p103 = por %p101, %p102
      %p104 = scmp.ne.s32.totalorder %s93, %s94
      %p105 = scmp.eq.s32.totalorder %s17, 0
      %p106 = por %p104, %p105
      %p107 = scmp.ne.s32.totalorder %s93, %s94
      %p108 = scmp.eq.s32.totalorder %s18, 1
      %p109 = por %p107, %p108
      %p111 = scmp.ne.s32.totalorder %s94, %s110
      %p112 = scmp.eq.s32.totalorder %s18, 0
      %p113 = por %p111, %p112
      %p114 = scmp.le.s32.totalorder 1, %s12
      %p115 = scmp.lt.s32.totalorder %s12, 3
      %p116 = pnand %p114, %p115
      %p117 = pneg %p116
      // Predicated region
      $region9: #{_lambda_.1} parent=5 // pred_check
        _
      $region10: #{_lambda_.1} parent=5 // pred_check_branch
        %119 = sbr.rel (%p116) target = $region12
      $region11: #{_lambda_.1} parent=5 // pred_region
        %s120 = ssub.s32 %s12, 1
        // Predicated region
        $region13: #{_lambda_.1} parent=11 // pred_check
          %p121 = pneg %p59
        $region14: #{_lambda_.1} parent=11 // pred_check_branch
          %123 = sbr.rel (%p121) target = $region16
        $region15: #{_lambda_.1} parent=11 // pred_region
          _
        $region16: #{_lambda_.1} parent=11 // pred_fallthru
          _
        // Predicated region
        $region17: #{_lambda_.1} parent=11 // pred_check
          %p124 = pneg %p80
        $region18: #{_lambda_.1} parent=11 // pred_check_branch
          %126 = sbr.rel (%p124) target = $region20
        $region19: #{_lambda_.1} parent=11 // pred_region
          _
        $region20: #{_lambda_.1} parent=11 // pred_fallthru
          _
      $region12: #{_lambda_.1} parent=5 // pred_fallthru
        _
      %p127 = scmp.lt.s32.totalorder %s12, 2
      // Predicated region
      $region21: #{_lambda_.1} parent=5 // pred_check
        %p128 = pneg %p127
      $region22: #{_lambda_.1} parent=5 // pred_check_branch
        %130 = sbr.rel (%p128) target = $region24
      $region23: #{_lambda_.1} parent=5 // pred_region
        // Predicated region
        $region25: #{_lambda_.1} parent=23 // pred_check
          %p131 = pneg %p32
        $region26: #{_lambda_.1} parent=23 // pred_check_branch
          %133 = sbr.rel (%p131) target = $region28
        $region27: #{_lambda_.1} parent=23 // pred_region
          %s134 = smul.u32 2, %s12
          %p135 = scmp.lt.s32.totalorder %s134, 3
          %s136 = scalar_select %p135, %s134, 3
          %s137 = smul.addr %s136, 4
          %s138 = scalar_lea.vmem %s0, %s137
          %s139 = smul.u32 2, %s12
        $region28: #{_lambda_.1} parent=23 // pred_fallthru
          _
      $region24: #{_lambda_.1} parent=5 // pred_fallthru
        _
      %p140 = scmp.le.s32.totalorder 1, %s12
      %p141 = scmp.lt.s32.totalorder %s12, 3
      %p142 = pnand %p140, %p141
      %p143 = pneg %p142
      // Predicated region
      $region29: #{_lambda_.1} parent=5 // pred_check
        _
      $region30: #{_lambda_.1} parent=5 // pred_check_branch
        %145 = sbr.rel (%p142) target = $region32
      $region31: #{_lambda_.1} parent=5 // pred_region
        %s146 = ssub.s32 %s12, 1
        %s147 = smul.u32 2, %s17
        %p148 = scmp.lt.s32.totalorder %s147, 3
        %s149 = scalar_select %p148, %s147, 3
        %s150 = smul.addr %s149, 4
        %s151 = scalar_lea.vmem %s0, %s150
        %p152 = pneg %p38
        %p153 = pneg %p35
        %p154 = pneg %p59
        %p155 = pneg %p56
        %p156 = pneg %p80
        %p157 = pneg %p77
        %p158 = pneg %p106
        %p159 = pneg %p103
        %s160 = sand.u32 %s93, 1
        %s161 = scalar_lea.sflag [#allocation3], %s160
        %s162 = sand.u32 %s93, 1
        %s163 = smul.addr %s162, 8
        %s164 = scalar_lea.vmem [#allocation2], %s163
        %s165 = smul.u32 2, %s17
        %p166 = scmp.lt.s32.totalorder %s165, 3
        %s167 = scalar_select %p166, %s165, 3
        %s168 = smul.addr %s167, 4
        %s169 = scalar_lea.vmem %s0, %s168
        %s170 = smul.u32 2, %s17
        %s171 = smul.u32 2, %s17
        %v173 = vld [vmem:[%s169] sm:$0xf]
        %v174 = vld [vmem:[%s169 + $0x4] sm:$0xf]
        %v175 = vld [vmem:[%s1] sm:$0xf]
        %v176 = vld [vmem:[%s1 + $0x4] sm:$0xf]
        %v177 = vld [vmem:[%s1 + $0x8] sm:$0xf]
        %v178 = vld [vmem:[%s1 + $0xc] sm:$0xf]
        %v179 = vld [vmem:[%s1 + $0x10] sm:$0xf]
        %v180 = vld [vmem:[%s1 + $0x14] sm:$0xf]
        %v181 = vld [vmem:[%s1 + $0x18] sm:$0xf]
        %v182 = vld [vmem:[%s1 + $0x1c] sm:$0xf]
        %v183 = vld [vmem:[%s1 + $0x20] sm:$0xf]
        %v184 = vld [vmem:[%s1 + $0x24] sm:$0xf]
        %v185 = vld [vmem:[%s1 + $0x28] sm:$0xf]
        %v186 = vld [vmem:[%s1 + $0x2c] sm:$0xf]
        %v187 = vld [vmem:[%s1 + $0x30] sm:$0xf]
        %v188 = vld [vmem:[%s1 + $0x34] sm:$0xf]
        %v189 = vld [vmem:[%s1 + $0x38] sm:$0xf]
        %v190 = vld [vmem:[%s1 + $0x3c] sm:$0xf]
        %v191 = vld [vmem:[%s2] sm:$0x1]
        %v193 = vlaneseq
        %v194 = vshrl.u32 %v193, 7
        %v195 = vsub.s32 0, %v194
        %v196 = vrot.slane %v191, %v195
        %v200 = vunpack.c.l.b16 %v173
        %v201 = vunpack.c.l.b16 %v174
        %v202 = vpack.c.b16 %v201, %v200
        %v220 = vunpack.c.l.b16 %v175
        %v221 = vunpack.c.l.b16 %v176
        %v222 = vunpack.c.l.b16 %v177
        %v223 = vunpack.c.l.b16 %v178
        %v224 = vunpack.c.l.b16 %v179
        %v225 = vunpack.c.l.b16 %v180
        %v226 = vunpack.c.l.b16 %v181
        %v227 = vunpack.c.l.b16 %v182
        %v228 = vunpack.c.l.b16 %v183
        %v229 = vunpack.c.l.b16 %v184
        %v230 = vunpack.c.l.b16 %v185
        %v231 = vunpack.c.l.b16 %v186
        %v232 = vunpack.c.l.b16 %v187
        %v233 = vunpack.c.l.b16 %v188
        %v234 = vunpack.c.l.b16 %v189
        %v235 = vunpack.c.l.b16 %v190
        %v236 = vpack.c.b16 %v221, %v220
        %v237 = vpack.c.b16 %v223, %v222
        %v238 = vpack.c.b16 %v225, %v224
        %v239 = vpack.c.b16 %v227, %v226
        %v240 = vpack.c.b16 %v229, %v228
        %v241 = vpack.c.b16 %v231, %v230
        %v242 = vpack.c.b16 %v233, %v232
        %v243 = vpack.c.b16 %v235, %v234
        %252 = vmatprep.subr.bf16.mxu0 0
        %253 = vmatpush1.bf16.msra.mxu0 %v236
        %254 = vmatprep.subr.bf16.mxu0 0
        %255 = vmatpush1.bf16.msra.mxu0 %v237
        %256 = vmatprep.subr.bf16.mxu0 0
        %257 = vmatpush1.bf16.msra.mxu0 %v238
        %258 = vmatprep.subr.bf16.mxu0 0
        %259 = vmatpush1.bf16.msra.mxu0 %v239
        %260 = vmatprep.subr.bf16.mxu0 0
        %261 = vmatpush1.bf16.msra.mxu0 %v240
        %262 = vmatprep.subr.bf16.mxu0 0
        %263 = vmatpush1.bf16.msra.mxu0 %v241
        %264 = vmatprep.subr.bf16.mxu0 0
        %265 = vmatpush1.bf16.msra.mxu0 %v242
        %266 = vmatprep.subr.bf16.mxu0 0
        %267 = vmatpush1.bf16.msra.mxu0 %v243
        %268 = vmatprep.subr.bf16.mxu0 0
        %269 = vmatpush1.bf16.msra.mxu0 0
        %270 = vmatprep.subr.bf16.mxu0 0
        %271 = vmatpush1.bf16.msra.mxu0 0
        %272 = vmatprep.subr.bf16.mxu0 0
        %273 = vmatpush1.bf16.msra.mxu0 0
        %274 = vmatprep.subr.bf16.mxu0 0
        %275 = vmatpush1.bf16.msra.mxu0 0
        %276 = vmatprep.subr.bf16.mxu0 0
        %277 = vmatpush1.bf16.msra.mxu0 0
        %278 = vmatprep.subr.bf16.mxu0 0
        %279 = vmatpush1.bf16.msra.mxu0 0
        %280 = vmatprep.subr.bf16.mxu0 0
        %281 = vmatpush1.bf16.msra.mxu0 0
        %282 = vmatprep.subr.bf16.mxu0 0
        %283 = vmatpush1.bf16.msra.mxu0 0
        %284 = vmatprep.mubr.bf16.mxu0 0
        %285 = vmatmul.mubr.bf16.gmra.mrb[0].mxu0 %v202
        %v286 = vpop.f32.mrb[0].mxu0
        %v287 = vadd.f32 %v196, %v286
        %v288 = vpop.f32.mrb[0].mxu0
        %v289 = vpop.f32.mrb[0].mxu0
        %v290 = vadd.f32 %v196, %v289
        %v291 = vpop.f32.mrb[0].mxu0
        %292 = vdwg.mxu0
        %v293 = vpack.c.bf16 %v290, %v287
        %v295 = vunpack.c.l.b16 %v293
        %v296 = vunpack.c.h.b16 %v293
        %v297 = vpack.c.b16 %v295, %v295
        %v298 = vpack.c.b16 %v296, %v296
        %vm301 = vcmask 257024
        %302 = vst.msk [vmem:[%s164] sm:$0xf] %vm301, %v297
        %303 = vst.msk [vmem:[%s164 + $0x4] sm:$0xf] %vm301, %v298
        %s304 = sand.u32 %s93, 1
        %s305 = scalar_lea.sflag [#allocation3], %s304
        %s306 = sand.u32 %s93, 1
        %s307 = smul.addr %s306, 8
        %s308 = scalar_lea.vmem [#allocation2], %s307
        // Predicated region
        $region33: #{_lambda_.1} parent=31 // pred_check
          %p309 = pneg %p103
        $region34: #{_lambda_.1} parent=31 // pred_check_branch
          %311 = sbr.rel (%p309) target = $region36
        $region35: #{_lambda_.1} parent=31 // pred_region
          %s312 = smul.u32 2, %s17
          %s314 = ssub.s32 128, 128
          %315 = vsyncadd %s305, %s314
          %s316 = smul.addr %s312, 64
          %s317 = scalar_lea.hbm %s3, %s316
          %s318 = sshll.u32 %s308, 4
          %s319 = int_to_ptr.vmem [resolvable:$true] %s318
          %324 = dma.vmem_to_hbm [thread:$0]  %s319, 128, %s317, %s305, 64, 64, 4
        $region36: #{_lambda_.1} parent=31 // pred_fallthru
          _
      $region32: #{_lambda_.1} parent=5 // pred_fallthru
        _
      %p325 = scmp.le.s32.totalorder 2, %s12
      // Predicated region
      $region37: #{_lambda_.1} parent=5 // pred_check
        %p326 = pneg %p325
      $region38: #{_lambda_.1} parent=5 // pred_check_branch
        %328 = sbr.rel (%p326) target = $region40
      $region39: #{_lambda_.1} parent=5 // pred_region
        %s329 = ssub.s32 %s12, 2
        // Predicated region
        $region41: #{_lambda_.1} parent=39 // pred_check
          %p330 = pneg %p109
        $region42: #{_lambda_.1} parent=39 // pred_check_branch
          %332 = sbr.rel (%p330) target = $region44
        $region43: #{_lambda_.1} parent=39 // pred_region
          %s333 = sand.u32 %s94, 1
          %s334 = scalar_lea.sflag [#allocation3], %s333
          %s335 = sand.u32 %s94, 1
          %s336 = smul.addr %s335, 8
          %s337 = scalar_lea.vmem [#allocation2], %s336
          %338 = dma.done %s334, 128
        $region44: #{_lambda_.1} parent=39 // pred_fallthru
          _
      $region40: #{_lambda_.1} parent=5 // pred_fallthru
        _
    $region6: #{_lambda_.1} parent=1 // loop_footer
      %s16 = sadd.s32 1, %s12
    $region7: #{_lambda_.1} parent=1 // loop_footer_branch
      %11 = sbr.rel target = $region3
    $region8: #{_lambda_.1} parent=1 // loop_exit
      _
    %339 = vsyncpa [#allocation3], 1
    %s340 = scalar_lea.sflag [#allocation3], 1
    %341 = vsyncpa %s340, 1

</llo_original>
